<compile_context>
chip_gen: v7x
topology: tpu7x:2x2x1
jax: 0.10.0
libtpu: 0.0.40
codegen_flags: <defaults>
</compile_context>

<pallas_src>
import functools
import math

import jax
import jax.numpy as jnp
from jax import lax
from jax.experimental import pallas as pl
from jax.experimental.pallas import tpu as pltpu


def _project_sim_kernel(q_ref, p_ref, wq_ref, wp_ref, out_ref):
    """One grid step == one batch element.

    q_ref  : (1, 1, D_pad)    bf16   pooled question for this batch
    p_ref  : (1, N_pad, D_pad) bf16  pooled passages for this batch
    wq_ref : (D_pad, D_pad)   bf16   question projection (resident)
    wp_ref : (D_pad, D_pad)   bf16   passage projection (resident)
    out_ref: (1, 1, N_pad)    f32    origin_sim row for this batch
    """
    # Dense projections (surrogate encoder heads): bf16 in, f32 accumulate.
    q_rep = jnp.dot(q_ref[0], wq_ref[...],
                    preferred_element_type=jnp.float32)          # (1, D_pad)
    p_rep = jnp.dot(p_ref[0], wp_ref[...],
                    preferred_element_type=jnp.float32)          # (N_pad, D_pad)

    # sim = einsum('bd,bid->bi') restricted to this batch: bf16 MXU matmul,
    # f32 accumulate (padded passage rows are exact zeros -> zero sims).
    s = lax.dot_general(q_rep.astype(jnp.bfloat16), p_rep.astype(jnp.bfloat16),
                        dimension_numbers=(((1,), (1,)), ((), ())),
                        preferred_element_type=jnp.float32)      # (1, N_pad)
    out_ref[0] = s


def _gates_kernel(alpha, temp, l, r, n_valid,
                  bias_ref, osim_ref, u_ref,
                  sim_ref, gates_ref, scalars_ref):
    """Gridless finalize over the tiny (B, N_pad) similarity map."""
    B, N_pad = osim_ref.shape
    osim = osim_ref[...]

    lane = lax.broadcasted_iota(jnp.int32, (B, N_pad), 1)
    valid = lane < n_valid
    big = jnp.float32(3.0e38)

    # Global min / max over valid columns only (two-step reductions).
    mn = jnp.min(jnp.min(jnp.where(valid, osim, big), axis=1, keepdims=True),
                 axis=0, keepdims=True)                          # (1, 1)
    mx = jnp.max(jnp.max(jnp.where(valid, osim, -big), axis=1, keepdims=True),
                 axis=0, keepdims=True)                          # (1, 1)
    inv_range = 1.0 / (mx - mn + jnp.float32(1e-12))             # exact (scalar)
    sim_n = 20.0 * ((osim - mn) * inv_range - 0.5) + bias_ref[0]
    sim_ref[...] = sim_n

    # gates = RectifiedStreched(BinaryConcrete(temp, sim_n), l, r).rsample()
    # x = sigmoid((logit(u) + logits)/temp); stretch l + (r-l)*x; clamp [0,1].
    u = u_ref[...]
    logistic = -jnp.log(1.0 / u - 1.0)                           # logit(u), fused
    x = jax.nn.sigmoid((logistic + sim_n) * jnp.float32(1.0 / temp))
    gates_ref[...] = jnp.clip(l + (r - l) * x, 0.0, 1.0)

    # expected_L0 = exp(log_expected_L0) = sigmoid(logits - temp*log(-l/r))
    log_ratio = math.log(-l / r)                                 # Python-time const
    expected_l0 = jax.nn.sigmoid(sim_n - temp * log_ratio)
    expected_l0 = jnp.where(valid, expected_l0, 0.0)             # drop padded cols
    loss_l0 = jnp.sum(jnp.sum(expected_l0, axis=1, keepdims=True),
                      axis=0, keepdims=True) * jnp.float32(1.0 / B)

    # TODO(synk): fid_setter/FiDT5 (frozen seq2seq answer loss + logits) has no
    # clean Pallas equivalent; loss_ans is fixed to 0 here.
    loss_ans = jnp.zeros((1, 1), jnp.float32)
    loss = loss_ans + alpha * loss_l0

    # Pack the three scalars into one lane-dense (1, 128) output tile.
    k = lax.broadcasted_iota(jnp.int32, (1, 128), 1)
    scalars_ref[...] = (jnp.where(k == 0, loss, 0.0)
                        + jnp.where(k == 1, loss_ans, 0.0)
                        + jnp.where(k == 2, loss_l0, 0.0))


def _round_up(x, m):
    return ((x + m - 1) // m) * m


def mrag_forward(params, inputs, *, n_context, alpha, rng_key):
    emb, wq, wp = params["emb"], params["w_q"], params["w_p"]
    bias_in = params["bias_in"]

    dpr_q = inputs["dpr_question"]       # (B, Lq) int32 token ids
    dpr_p = inputs["dpr_passages"]       # (B, N, Lp) int32 token ids
    B, N, _ = dpr_p.shape
    assert N == n_context
    D = emb.shape[1]
    D_pad = _round_up(D, 128)
    N_pad = _round_up(N, 128)

    # TODO(synk): MDenseModel.encode_query/encode_passage are full HF transformer
    # encoders; modeled here as embedding lookup + mean pool (glue) + linear
    # projection (the projection matmuls run on the MXU inside the Pallas kernel).
    q_pooled = jnp.mean(emb[dpr_q], axis=1)                      # (B, D) f32
    p_pooled = jnp.mean(emb[dpr_p], axis=2)                      # (B, N, D) f32

    # Lane-dense padding (D -> D_pad, N -> N_pad) + bf16 MXU inputs.
    q_pad = jnp.pad(q_pooled, ((0, 0), (0, D_pad - D)))
    q_pad = q_pad.reshape(B, 1, D_pad).astype(jnp.bfloat16)
    p_pad = jnp.pad(p_pooled, ((0, 0), (0, N_pad - N), (0, D_pad - D)))
    p_pad = p_pad.astype(jnp.bfloat16)                           # (B, N_pad, D_pad)
    wq_pad = jnp.pad(wq, ((0, D_pad - D), (0, D_pad - D))).astype(jnp.bfloat16)
    wp_pad = jnp.pad(wp, ((0, D_pad - D), (0, D_pad - D))).astype(jnp.bfloat16)

    # Kernel 1: per-batch projection + similarity, batch axis is "parallel"
    # (megacore on v7x); BlockSpec double-buffers the passage tile DMA.
    origin_sim3 = pl.pallas_call(
        _project_sim_kernel,
        grid=(B,),
        in_specs=[
            pl.BlockSpec((1, 1, D_pad), lambda b: (b, 0, 0)),
            pl.BlockSpec((1, N_pad, D_pad), lambda b: (b, 0, 0)),
            pl.BlockSpec((D_pad, D_pad), lambda b: (0, 0)),
            pl.BlockSpec((D_pad, D_pad), lambda b: (0, 0)),
        ],
        out_specs=pl.BlockSpec((1, 1, N_pad), lambda b: (b, 0, 0)),
        out_shape=jax.ShapeDtypeStruct((B, 1, N_pad), jnp.float32),
        compiler_params=pltpu.CompilerParams(
            dimension_semantics=("parallel",)),
    )(q_pad, p_pad, wq_pad, wp_pad)
    origin_sim_p = origin_sim3.reshape(B, N_pad)

    # rsample noise drawn with jax.random (portable; no Mosaic-only PRNG).
    u = jax.random.uniform(rng_key, (B, N_pad), jnp.float32,
                           minval=1e-6, maxval=1.0 - 1e-6)
    bias_in_1d = jnp.reshape(bias_in, (1,)).astype(jnp.float32)

    # Kernel 2: gridless finalize over the tiny (B, N_pad) similarity map.
    kernel2 = functools.partial(_gates_kernel, float(alpha), 0.2, -0.2, 1.0, N)
    vmem = pl.BlockSpec(memory_space=pltpu.MemorySpace.VMEM)
    smem = pl.BlockSpec(memory_space=pltpu.MemorySpace.SMEM)
    mat = jax.ShapeDtypeStruct((B, N_pad), jnp.float32)
    sim_p, gates_p, scalars = pl.pallas_call(
        kernel2,
        in_specs=[smem, vmem, vmem],
        out_specs=(vmem, vmem, vmem),
        out_shape=(mat, mat, jax.ShapeDtypeStruct((1, 128), jnp.float32)),
    )(bias_in_1d, origin_sim_p, u)

    loss = scalars[0, 0]
    loss_ans = scalars[0, 1]
    loss_l0 = scalars[0, 2]
    return (loss, loss_ans, loss_l0,
            origin_sim_p[:, :N], sim_p[:, :N], gates_p[:, :N])


if __name__ == "__main__":
    key = jax.random.PRNGKey(0)
    k_emb, k_wq, k_wp, k_q, k_p, k_u, k_ph = jax.random.split(key, 7)

    # small shapes consistent with the forward: batch=2, n_context=4, seq=8, hidden=32
    B, N, Lq, Lp, D, vocab = 2, 4, 8, 8, 32, 64

    params = {
        "emb": jax.random.normal(k_emb, (vocab, D), jnp.float32) * 0.02,
        "w_q": jax.random.normal(k_wq, (D, D), jnp.float32) / jnp.sqrt(jnp.float32(D)),
        "w_p": jax.random.normal(k_wp, (D, D), jnp.float32) / jnp.sqrt(jnp.float32(D)),
        "bias_in": jnp.float32(5.0),
        "bias_out": jnp.float32(-10.0),   # defined in mrag.__init__, unused in forward
        # analogue of MDenseModel.placeholder (xavier-normal (1,1,768*200) in the
        # original); only consumed by fid_setter, which is not implemented here.
        "placeholder": jax.random.normal(k_ph, (1, 1, D * N), jnp.float32) * 0.1,
    }

    inputs = {
        "dpr_question": jax.random.randint(k_q, (B, Lq), 0, vocab, dtype=jnp.int32),
        "dpr_passages": jax.random.randint(k_p, (B, N, Lp), 0, vocab, dtype=jnp.int32),
        # fid_answer_ids / fid_passage_ids / fid_passage_mask omitted: consumed
        # only by the FiDT5 branch (see TODO(synk) in the kernel).
    }

    outs = mrag_forward(params, inputs, n_context=N, alpha=0.5, rng_key=k_u)
    outs = jax.block_until_ready(outs)
    print("KERNEL_OK")
</pallas_src>

<mosaic_0001>
module attributes {stable_mosaic.version = 11 : i64} {
  func.func @_project_sim_kernel(%arg0: i32, %arg1: memref<1x1x128xbf16, #tpu.memory_space<vmem>>, %arg2: memref<1x128x128xbf16, #tpu.memory_space<vmem>>, %arg3: memref<128x128xbf16, #tpu.memory_space<vmem>>, %arg4: memref<128x128xbf16, #tpu.memory_space<vmem>>, %arg5: memref<1x1x128xf32, #tpu.memory_space<vmem>>) attributes {dimension_semantics = [#tpu.dimension_semantics<parallel>], iteration_bounds = array<i64: 2>, scalar_prefetch = 0 : i64, scratch_operands = 0 : i64, tpu.core_type = #tpu.core_type<tc>, window_params = [{transform_indices = @transform_0, window_bounds = array<i64: 1, 1, 128>}, {transform_indices = @transform_1, window_bounds = array<i64: 1, 128, 128>}, {pipeline_mode = #tpu.pipeline_mode<synchronous>, transform_indices = @transform_2, window_bounds = array<i64: 128, 128>}, {pipeline_mode = #tpu.pipeline_mode<synchronous>, transform_indices = @transform_3, window_bounds = array<i64: 128, 128>}, {transform_indices = @transform_4, window_bounds = array<i64: 1, 1, 128>}]} {
    %c0 = arith.constant 0 : index
    %c0_0 = arith.constant 0 : index
    %c0_1 = arith.constant 0 : index
    %0 = vector.load %arg1[%c0, %c0_0, %c0_1] : memref<1x1x128xbf16, #tpu.memory_space<vmem>>, vector<1x1x128xbf16>
    %1 = vector.shape_cast %0 : vector<1x1x128xbf16> to vector<1x128xbf16>
    %c0_2 = arith.constant 0 : index
    %c0_3 = arith.constant 0 : index
    %2 = vector.load %arg3[%c0_2, %c0_3] : memref<128x128xbf16, #tpu.memory_space<vmem>>, vector<128x128xbf16>
    %cst = arith.constant dense<0.000000e+00> : vector<1x128xf32>
    %3 = tpu.matmul %1, %2, %cst {dimension_numbers = #tpu.dot_dimension_numbers<[1], [0], [0], [1], [0, 0, 1, 1], [], []>} : vector<1x128xbf16>, vector<128x128xbf16>, vector<1x128xf32> -> vector<1x128xf32>
    %c0_4 = arith.constant 0 : index
    %c0_5 = arith.constant 0 : index
    %c0_6 = arith.constant 0 : index
    %4 = vector.load %arg2[%c0_4, %c0_5, %c0_6] : memref<1x128x128xbf16, #tpu.memory_space<vmem>>, vector<1x128x128xbf16>
    %5 = vector.shape_cast %4 : vector<1x128x128xbf16> to vector<128x128xbf16>
    %c0_7 = arith.constant 0 : index
    %c0_8 = arith.constant 0 : index
    %6 = vector.load %arg4[%c0_7, %c0_8] : memref<128x128xbf16, #tpu.memory_space<vmem>>, vector<128x128xbf16>
    %cst_9 = arith.constant dense<0.000000e+00> : vector<128x128xf32>
    %7 = tpu.matmul %5, %6, %cst_9 {dimension_numbers = #tpu.dot_dimension_numbers<[1], [0], [0], [1], [0, 0, 1, 1], [], []>} : vector<128x128xbf16>, vector<128x128xbf16>, vector<128x128xf32> -> vector<128x128xf32>
    %8 = arith.truncf %3 : vector<1x128xf32> to vector<1x128xbf16>
    %9 = arith.truncf %7 : vector<128x128xf32> to vector<128x128xbf16>
    %cst_10 = arith.constant dense<0.000000e+00> : vector<1x128xf32>
    %10 = tpu.matmul %8, %9, %cst_10 {dimension_numbers = #tpu.dot_dimension_numbers<[1], [1], [0], [0], [0, 0, 1, 0], [], []>} : vector<1x128xbf16>, vector<128x128xbf16>, vector<1x128xf32> -> vector<1x128xf32>
    %c0_11 = arith.constant 0 : index
    %c0_12 = arith.constant 0 : index
    %c0_13 = arith.constant 0 : index
    %11 = vector.load %arg5[%c0_11, %c0_12, %c0_13] : memref<1x1x128xf32, #tpu.memory_space<vmem>>, vector<1x1x128xf32>
    %12 = vector.shape_cast %11 : vector<1x1x128xf32> to vector<1x128xf32>
    %13 = vector.shape_cast %10 : vector<1x128xf32> to vector<1x1x128xf32>
    tpu.vector_store %arg5[%c0_11, %c0_12, %c0_13], %13 {strides = array<i32>} : memref<1x1x128xf32, #tpu.memory_space<vmem>>, vector<1x1x128xf32>,
    return
  }
  func.func @transform_0(%arg0: i32) -> (i32, i32, i32) {
    %c0_i32 = arith.constant 0 : i32
    %c0_i32_0 = arith.constant 0 : i32
    %c0_i32_1 = arith.constant 0 : i32
    return %arg0, %c0_i32, %c0_i32_0 : i32, i32, i32
  }
  func.func @transform_1(%arg0: i32) -> (i32, i32, i32) {
    %c0_i32 = arith.constant 0 : i32
    %c0_i32_0 = arith.constant 0 : i32
    %c0_i32_1 = arith.constant 0 : i32
    return %arg0, %c0_i32, %c0_i32_0 : i32, i32, i32
  }
  func.func @transform_2(%arg0: i32) -> (i32, i32) {
    %c0_i32 = arith.constant 0 : i32
    %c0_i32_0 = arith.constant 0 : i32
    %c0_i32_1 = arith.constant 0 : i32
    return %c0_i32, %c0_i32_0 : i32, i32
  }
  func.func @transform_3(%arg0: i32) -> (i32, i32) {
    %c0_i32 = arith.constant 0 : i32
    %c0_i32_0 = arith.constant 0 : i32
    %c0_i32_1 = arith.constant 0 : i32
    return %c0_i32, %c0_i32_0 : i32, i32
  }
  func.func @transform_4(%arg0: i32) -> (i32, i32, i32) {
    %c0_i32 = arith.constant 0 : i32
    %c0_i32_0 = arith.constant 0 : i32
    %c0_i32_1 = arith.constant 0 : i32
    return %arg0, %c0_i32, %c0_i32_0 : i32, i32, i32
  }
}

</mosaic_0001>

<llo_original>
// kernel: tpu_custom_call.1
$region0: #{tpu_custom_call.1}
  #allocation0 [shape = 'u32[]', space=smem, size = 0x4, offset = 0x4, fixed_abs, tag = 'smem constant byte address 0x4 - core index']
  #allocation1 [shape = 'u32[144,128]{1,0:T(1,128)}', space=vmem, size = 0x12000, scoped, tag = 'internal scratch']
  %s0 = inlined_call_operand.vmem [shape: bf16[2,1,128], index: 0, kind: input, shape index: {}]
  %s1 = inlined_call_operand.hbm [shape: bf16[2,128,128], index: 1, kind: input, shape index: {}]
  %s2 = inlined_call_operand.hbm [shape: bf16[128,128], index: 2, kind: input, shape index: {}]
  %s3 = inlined_call_operand.hbm [shape: bf16[128,128], index: 3, kind: input, shape index: {}]
  %s4 = inlined_call_operand.hbm [shape: f32[2,1,128], index: 4, kind: output, shape index: {}]
  %s5 = sld [smem:[#allocation0]]
  $region61: #{tpu_custom_call.1} parent=0
    _
  %s7 = ssub.s32 1, %s5
  %s8 = scalar_select 0, %s7, %s5
  $region1: #{tpu_custom_call.1} parent=0
    #allocation2 [shape = 'u8[65536]{0}', space=vmem, size = 0x10000, scoped, tag = 'input window, operand 1']
    #allocation3 [shape = 's32[2]{0}', space=sflag, size = 0x8, scoped, tag = 'scoped memory for tpu_custom_call.1']
    #allocation4 [shape = 's32[2]{0}', space=sflag, size = 0x8, scoped, tag = 'scoped memory for tpu_custom_call.1']
    #allocation5 [shape = 'u8[32768]{0}', space=vmem, size = 0x8000, scoped, tag = 'input window, operand 2, single buffered']
    #allocation6 [shape = 's32[1]{0}', space=sflag, size = 0x4, scoped, tag = 'scoped memory for tpu_custom_call.1']
    #allocation7 [shape = 'u8[32768]{0}', space=vmem, size = 0x8000, scoped, tag = 'input window, operand 3, single buffered']
    #allocation8 [shape = 'u8[1024]{0}', space=vmem, size = 0x400, scoped, tag = 'output window, operand 0']
    %9 = vsyncpa [#allocation3], 0
    %s10 = scalar_lea.sflag [#allocation3], 1
    %11 = vsyncpa %s10, 0
    %12 = vsyncpa [#allocation6], 0
    %13 = vsyncpa [#allocation4], 0
    %s14 = scalar_lea.sflag [#allocation4], 1
    %15 = vsyncpa %s14, 0
    loop: start=0, step=1, limit=4
    $region2: #{tpu_custom_call.1} parent=1 // loop_pre_header
      _
    $region3: #{tpu_custom_call.1} parent=1 // loop_header
      %s17 = sphi 0, %s21
      %p18 = scmp.ge.s32.totalorder %s17, 4
      %s27 = sphi 0, %s29
      %s30 = sphi 0, %s27
      %s31 = sphi 0, %s30
      %s47 = sphi 0, %s31
      %s53 = sphi 0, %s55
      %s56 = sphi 0, %s53
      %s57 = sphi 0, %s56
      %s73 = sphi 0, %s57
      %s77 = sphi 0, %s77
      %s79 = sphi 0, %s77
      %s80 = sphi 0, %s79
      %s94 = sphi 0, %s80
      %s98 = sphi 0, %s98
      %s100 = sphi 0, %s98
      %s101 = sphi 0, %s100
      %s115 = sphi 0, %s101
      %s121 = sphi 0, %s123
      %s124 = sphi 0, %s121
      %s125 = sphi 0, %s124
      %s141 = sphi 0, %s125
    $region4: #{tpu_custom_call.1} parent=1 // loop_header_branch
      %20 = sbr.rel (%p18) target = $region8
    $region5: #{tpu_custom_call.1} parent=1 // loop_body
      %s22 = ssub.s32 %s17, 1
      %s23 = ssub.s32 %s17, 2
      %s24 = sadd.s32 %s17, 1
      %s25 = ssub.s32 %s17, %s24
      %p26 = scmp.eq.s32.totalorder %s25, 0
      %s28 = sadd.s32 %s27, 1
      %s29 = scalar_select %p26, %s27, %s28
      %p32 = pneg %p26
      %p33 = scmp.eq.s32.totalorder %s17, 1
      %p34 = por %p32, %p33
      %p35 = scmp.ne.s32.totalorder %s27, %s30
      %p36 = scmp.eq.s32.totalorder %s17, 0
      %p37 = por %p35, %p36
      %p38 = scmp.ne.s32.totalorder %s27, %s30
      %p39 = scmp.eq.s32.totalorder %s22, 1
      %p40 = por %p38, %p39
      %p41 = scmp.ne.s32.totalorder %s30, %s31
      %p42 = scmp.eq.s32.totalorder %s22, 0
      %p43 = por %p41, %p42
      %p44 = scmp.ne.s32.totalorder %s30, %s31
      %p45 = scmp.eq.s32.totalorder %s23, 1
      %p46 = por %p44, %p45
      %p48 = scmp.ne.s32.totalorder %s31, %s47
      %p49 = scmp.eq.s32.totalorder %s23, 0
      %p50 = por %p48, %p49
      %s51 = ssub.s32 %s17, %s24
      %p52 = scmp.eq.s32.totalorder %s51, 0
      %s54 = sadd.s32 %s53, 1
      %s55 = scalar_select %p52, %s53, %s54
      %p58 = pneg %p52
      %p59 = scmp.eq.s32.totalorder %s17, 1
      %p60 = por %p58, %p59
      %p61 = scmp.ne.s32.totalorder %s53, %s56
      %p62 = scmp.eq.s32.totalorder %s17, 0
      %p63 = por %p61, %p62
      %p64 = scmp.ne.s32.totalorder %s53, %s56
      %p65 = scmp.eq.s32.totalorder %s22, 1
      %p66 = por %p64, %p65
      %p67 = scmp.ne.s32.totalorder %s56, %s57
      %p68 = scmp.eq.s32.totalorder %s22, 0
      %p69 = por %p67, %p68
      %p70 = scmp.ne.s32.totalorder %s56, %s57
      %p71 = scmp.eq.s32.totalorder %s23, 1
      %p72 = por %p70, %p71
      %p74 = scmp.ne.s32.totalorder %s57, %s73
      %p75 = scmp.eq.s32.totalorder %s23, 0
      %p76 = por %p74, %p75
      %s78 = sadd.s32 %s77, 1
      %p81 = scmp.eq.s32.totalorder %s17, 1
      %p82 = scmp.ne.s32.totalorder %s77, %s79
      %p83 = scmp.eq.s32.totalorder %s17, 0
      %p84 = por %p82, %p83
      %p85 = scmp.ne.s32.totalorder %s77, %s79
      %p86 = scmp.eq.s32.totalorder %s22, 1
      %p87 = por %p85, %p86
      %p88 = scmp.ne.s32.totalorder %s79, %s80
      %p89 = scmp.eq.s32.totalorder %s22, 0
      %p90 = por %p88, %p89
      %p91 = scmp.ne.s32.totalorder %s79, %s80
      %p92 = scmp.eq.s32.totalorder %s23, 1
      %p93 = por %p91, %p92
      %p95 = scmp.ne.s32.totalorder %s80, %s94
      %p96 = scmp.eq.s32.totalorder %s23, 0
      %p97 = por %p95, %p96
      %s99 = sadd.s32 %s98, 1
      %p102 = scmp.eq.s32.totalorder %s17, 1
      %p103 = scmp.ne.s32.totalorder %s98, %s100
      %p104 = scmp.eq.s32.totalorder %s17, 0
      %p105 = por %p103, %p104
      %p106 = scmp.ne.s32.totalorder %s98, %s100
      %p107 = scmp.eq.s32.totalorder %s22, 1
      %p108 = por %p106, %p107
      %p109 = scmp.ne.s32.totalorder %s100, %s101
      %p110 = scmp.eq.s32.totalorder %s22, 0
      %p111 = por %p109, %p110
      %p112 = scmp.ne.s32.totalorder %s100, %s101
      %p113 = scmp.eq.s32.totalorder %s23, 1
      %p114 = por %p112, %p113
      %p116 = scmp.ne.s32.totalorder %s101, %s115
      %p117 = scmp.eq.s32.totalorder %s23, 0
      %p118 = por %p116, %p117
      %s119 = ssub.s32 %s17, %s24
      %p120 = scmp.eq.s32.totalorder %s119, 0
      %s122 = sadd.s32 %s121, 1
      %s123 = scalar_select %p120, %s121, %s122
      %p126 = pneg %p120
      %p127 = scmp.eq.s32.totalorder %s17, 1
      %p128 = por %p126, %p127
      %p129 = scmp.ne.s32.totalorder %s121, %s124
      %p130 = scmp.eq.s32.totalorder %s17, 0
      %p131 = por %p129, %p130
      %p132 = scmp.ne.s32.totalorder %s121, %s124
      %p133 = scmp.eq.s32.totalorder %s22, 1
      %p134 = por %p132, %p133
      %p135 = scmp.ne.s32.totalorder %s124, %s125
      %p136 = scmp.eq.s32.totalorder %s22, 0
      %p137 = por %p135, %p136
      %p138 = scmp.ne.s32.totalorder %s124, %s125
      %p139 = scmp.eq.s32.totalorder %s23, 1
      %p140 = por %p138, %p139
      %p142 = scmp.ne.s32.totalorder %s125, %s141
      %p143 = scmp.eq.s32.totalorder %s23, 0
      %p144 = por %p142, %p143
      %p145 = scmp.le.s32.totalorder 1, %s17
      %p146 = scmp.lt.s32.totalorder %s17, 3
      %p147 = pnand %p145, %p146
      %p148 = pneg %p147
      // Predicated region
      $region9: #{tpu_custom_call.1} parent=5 // pred_check
        _
      $region10: #{tpu_custom_call.1} parent=5 // pred_check_branch
        %150 = sbr.rel (%p147) target = $region12
      $region11: #{tpu_custom_call.1} parent=5 // pred_region
        %s151 = ssub.s32 %s17, 1
        // Predicated region
        $region13: #{tpu_custom_call.1} parent=11 // pred_check
          %p152 = pneg %p90
        $region14: #{tpu_custom_call.1} parent=11 // pred_check_branch
          %154 = sbr.rel (%p152) target = $region16
        $region15: #{tpu_custom_call.1} parent=11 // pred_region
          %s156 = ssub.s32 1024, 1024
          %157 = vsyncadd [#allocation6], %s156
          %s158 = sshll.u32 [#allocation5], 4
          %s159 = int_to_ptr.vmem [resolvable:$true] %s158
          %164 = dma.hbm_to_vmem [thread:$0]  %s2, 1024, %s159, [#allocation6], 64, 64, 4
        $region16: #{tpu_custom_call.1} parent=11 // pred_fallthru
          _
        // Predicated region
        $region17: #{tpu_custom_call.1} parent=11 // pred_check
          %p165 = pneg %p111
        $region18: #{tpu_custom_call.1} parent=11 // pred_check_branch
          %167 = sbr.rel (%p165) target = $region20
        $region19: #{tpu_custom_call.1} parent=11 // pred_region
          %s169 = ssub.s32 1024, 1024
          %170 = vsyncadd [#allocation6], %s169
          %s171 = sshll.u32 [#allocation7], 4
          %s172 = int_to_ptr.vmem [resolvable:$true] %s171
          %177 = dma.hbm_to_vmem [thread:$0]  %s3, 1024, %s172, [#allocation6], 64, 64, 4
        $region20: #{tpu_custom_call.1} parent=11 // pred_fallthru
          _
      $region12: #{tpu_custom_call.1} parent=5 // pred_fallthru
        _
      %p178 = scmp.lt.s32.totalorder %s17, 2
      // Predicated region
      $region21: #{tpu_custom_call.1} parent=5 // pred_check
        %p179 = pneg %p178
      $region22: #{tpu_custom_call.1} parent=5 // pred_check_branch
        %181 = sbr.rel (%p179) target = $region24
      $region23: #{tpu_custom_call.1} parent=5 // pred_region
        // Predicated region
        $region25: #{tpu_custom_call.1} parent=23 // pred_check
          %p182 = pneg %p37
        $region26: #{tpu_custom_call.1} parent=23 // pred_check_branch
          %184 = sbr.rel (%p182) target = $region28
        $region27: #{tpu_custom_call.1} parent=23 // pred_region
          %p185 = scmp.lt.s32.totalorder %s17, 1
          %s186 = scalar_select %p185, %s17, 1
          %s187 = scalar_lea.vmem %s0, %s186
        $region28: #{tpu_custom_call.1} parent=23 // pred_fallthru
          _
        // Predicated region
        $region29: #{tpu_custom_call.1} parent=23 // pred_check
          %p188 = pneg %p63
        $region30: #{tpu_custom_call.1} parent=23 // pred_check_branch
          %190 = sbr.rel (%p188) target = $region32
        $region31: #{tpu_custom_call.1} parent=23 // pred_region
          %s191 = sand.u32 %s53, 1
          %s192 = scalar_lea.sflag [#allocation3], %s191
          %s193 = sand.u32 %s53, 1
          %s194 = smul.addr %s193, 64
          %s195 = scalar_lea.vmem [#allocation2], %s194
          %s197 = ssub.s32 1024, 1024
          %198 = vsyncadd %s192, %s197
          %s199 = smul.addr %s17, 16
          %s200 = smul.addr %s199, 64
          %s201 = scalar_lea.hbm %s1, %s200
          %s202 = sshll.u32 %s195, 4
          %s203 = int_to_ptr.vmem [resolvable:$true] %s202
          %208 = dma.hbm_to_vmem [thread:$0]  %s201, 1024, %s203, %s192, 64, 64, 4
        $region32: #{tpu_custom_call.1} parent=23 // pred_fallthru
          _
      $region24: #{tpu_custom_call.1} parent=5 // pred_fallthru
        _
      %p209 = scmp.le.s32.totalorder 1, %s17
      %p210 = scmp.lt.s32.totalorder %s17, 3
      %p211 = pnand %p209, %p210
      %p212 = pneg %p211
      // Predicated region
      $region33: #{tpu_custom_call.1} parent=5 // pred_check
        _
      $region34: #{tpu_custom_call.1} parent=5 // pred_check_branch
        %214 = sbr.rel (%p211) target = $region36
      $region35: #{tpu_custom_call.1} parent=5 // pred_region
        %s215 = ssub.s32 %s17, 1
        %s216 = sand.u32 %s56, 1
        %s217 = scalar_lea.sflag [#allocation3], %s216
        %s218 = sand.u32 %s56, 1
        %s219 = smul.addr %s218, 64
        %s220 = scalar_lea.vmem [#allocation2], %s219
        // Predicated region
        $region37: #{tpu_custom_call.1} parent=35 // pred_check
          %p221 = pneg %p69
        $region38: #{tpu_custom_call.1} parent=35 // pred_check_branch
          %223 = sbr.rel (%p221) target = $region40
        $region39: #{tpu_custom_call.1} parent=35 // pred_region
          %224 = dma.done %s217, 1024
        $region40: #{tpu_custom_call.1} parent=35 // pred_fallthru
          _
        // Predicated region
        $region41: #{tpu_custom_call.1} parent=35 // pred_check
          %p225 = pneg %p90
        $region42: #{tpu_custom_call.1} parent=35 // pred_check_branch
          %227 = sbr.rel (%p225) target = $region44
        $region43: #{tpu_custom_call.1} parent=35 // pred_region
          %228 = dma.done [#allocation6], 1024
        $region44: #{tpu_custom_call.1} parent=35 // pred_fallthru
          _
        // Predicated region
        $region45: #{tpu_custom_call.1} parent=35 // pred_check
          %p229 = pneg %p111
        $region46: #{tpu_custom_call.1} parent=35 // pred_check_branch
          %231 = sbr.rel (%p229) target = $region48
        $region47: #{tpu_custom_call.1} parent=35 // pred_region
          %232 = dma.done [#allocation6], 1024
        $region48: #{tpu_custom_call.1} parent=35 // pred_fallthru
          _
        %p233 = scmp.lt.s32.totalorder %s22, 1
        %s234 = scalar_select %p233, %s22, 1
        %s235 = scalar_lea.vmem %s0, %s234
        %p236 = pneg %p43
        %p237 = pneg %p40
        %s238 = sand.u32 %s56, 1
        %s239 = scalar_lea.sflag [#allocation3], %s238
        %s240 = sand.u32 %s56, 1
        %s241 = smul.addr %s240, 64
        %s242 = scalar_lea.vmem [#allocation2], %s241
        %p243 = pneg %p69
        %p244 = pneg %p66
        %p245 = pneg %p90
        %p246 = pneg %p87
        %p247 = pneg %p111
        %p248 = pneg %p108
        %p249 = pneg %p137
        %p250 = pneg %p134
        %s251 = sand.u32 %s124, 1
        %s252 = scalar_lea.sflag [#allocation4], %s251
        %s253 = sand.u32 %s124, 1
        %s254 = scalar_lea.vmem [#allocation8], %s253
        %p255 = scmp.lt.s32.totalorder %s22, 1
        %s256 = scalar_select %p255, %s22, 1
        %s257 = scalar_lea.vmem %s0, %s256
        %v259 = vld [vmem:[%s257] sm:$0x1]
        %v260 = vld [vmem:[#allocation5] sm:$0xf]
        %v261 = vld [vmem:[#allocation5 + $0x4] sm:$0xf]
        %v262 = vld [vmem:[#allocation5 + $0x8] sm:$0xf]
        %v263 = vld [vmem:[#allocation5 + $0xc] sm:$0xf]
        %v264 = vld [vmem:[#allocation5 + $0x10] sm:$0xf]
        %v265 = vld [vmem:[#allocation5 + $0x14] sm:$0xf]
        %v266 = vld [vmem:[#allocation5 + $0x18] sm:$0xf]
        %v267 = vld [vmem:[#allocation5 + $0x1c] sm:$0xf]
        %v268 = vld [vmem:[#allocation5 + $0x20] sm:$0xf]
        %v269 = vld [vmem:[#allocation5 + $0x24] sm:$0xf]
        %v270 = vld [vmem:[#allocation5 + $0x28] sm:$0xf]
        %v271 = vld [vmem:[#allocation5 + $0x2c] sm:$0xf]
        %v272 = vld [vmem:[#allocation5 + $0x30] sm:$0xf]
        %v273 = vld [vmem:[#allocation5 + $0x34] sm:$0xf]
        %v274 = vld [vmem:[#allocation5 + $0x38] sm:$0xf]
        %v275 = vld [vmem:[#allocation5 + $0x3c] sm:$0xf]
        %v292 = vunpack.c.l.b16 %v260
        %v293 = vunpack.c.l.b16 %v261
        %v294 = vunpack.c.l.b16 %v262
        %v295 = vunpack.c.l.b16 %v263
        %v296 = vunpack.c.l.b16 %v264
        %v297 = vunpack.c.l.b16 %v265
        %v298 = vunpack.c.l.b16 %v266
        %v299 = vunpack.c.l.b16 %v267
        %v300 = vunpack.c.l.b16 %v268
        %v301 = vunpack.c.l.b16 %v269
        %v302 = vunpack.c.l.b16 %v270
        %v303 = vunpack.c.l.b16 %v271
        %v304 = vunpack.c.l.b16 %v272
        %v305 = vunpack.c.l.b16 %v273
        %v306 = vunpack.c.l.b16 %v274
        %v307 = vunpack.c.l.b16 %v275
        %v308 = vpack.c.b16 %v293, %v292
        %v309 = vpack.c.b16 %v295, %v294
        %v310 = vpack.c.b16 %v297, %v296
        %v311 = vpack.c.b16 %v299, %v298
        %v312 = vpack.c.b16 %v301, %v300
        %v313 = vpack.c.b16 %v303, %v302
        %v314 = vpack.c.b16 %v305, %v304
        %v315 = vpack.c.b16 %v307, %v306
        %324 = vmatprep.subr.bf16.mxu0 0
        %325 = vmatpush1.bf16.msra.mxu0 %v308
        %326 = vmatprep.subr.bf16.mxu0 0
        %327 = vmatpush1.bf16.msra.mxu0 %v309
        %328 = vmatprep.subr.bf16.mxu0 0
        %329 = vmatpush1.bf16.msra.mxu0 %v310
        %330 = vmatprep.subr.bf16.mxu0 0
        %331 = vmatpush1.bf16.msra.mxu0 %v311
        %332 = vmatprep.subr.bf16.mxu0 0
        %333 = vmatpush1.bf16.msra.mxu0 %v312
        %334 = vmatprep.subr.bf16.mxu0 0
        %335 = vmatpush1.bf16.msra.mxu0 %v313
        %336 = vmatprep.subr.bf16.mxu0 0
        %337 = vmatpush1.bf16.msra.mxu0 %v314
        %338 = vmatprep.subr.bf16.mxu0 0
        %339 = vmatpush1.bf16.msra.mxu0 %v315
        %340 = vmatprep.subr.bf16.mxu0 0
        %341 = vmatpush1.bf16.msra.mxu0 0
        %342 = vmatprep.subr.bf16.mxu0 0
        %343 = vmatpush1.bf16.msra.mxu0 0
        %344 = vmatprep.subr.bf16.mxu0 0
        %345 = vmatpush1.bf16.msra.mxu0 0
        %346 = vmatprep.subr.bf16.mxu0 0
        %347 = vmatpush1.bf16.msra.mxu0 0
        %348 = vmatprep.subr.bf16.mxu0 0
        %349 = vmatpush1.bf16.msra.mxu0 0
        %350 = vmatprep.subr.bf16.mxu0 0
        %351 = vmatpush1.bf16.msra.mxu0 0
        %352 = vmatprep.subr.bf16.mxu0 0
        %353 = vmatpush1.bf16.msra.mxu0 0
        %354 = vmatprep.subr.bf16.mxu0 0
        %355 = vmatpush1.bf16.msra.mxu0 0
        %356 = vmatprep.mubr.bf16.mxu0 0
        %357 = vmatmul.mubr.bf16.gmra.mrb[0].mxu0 %v259
        %v358 = vpop.f32.mrb[0].mxu0
        %v359 = vadd.f32 0.0, %v358
        %v360 = vpop.f32.mrb[0].mxu0
        %v361 = vpop.f32.mrb[0].mxu0
        %v362 = vpop.f32.mrb[0].mxu0
        %363 = vdwg.mxu0
        %v364 = vld [vmem:[%s220] sm:$0xf]
        %v365 = vld [vmem:[%s220 + $0x4] sm:$0xf]
        %v366 = vld [vmem:[%s220 + $0x8] sm:$0xf]
        %v367 = vld [vmem:[%s220 + $0xc] sm:$0xf]
        %v368 = vld [vmem:[%s220 + $0x10] sm:$0xf]
        %v369 = vld [vmem:[%s220 + $0x14] sm:$0xf]
        %v370 = vld [vmem:[%s220 + $0x18] sm:$0xf]
        %v371 = vld [vmem:[%s220 + $0x1c] sm:$0xf]
        %v372 = vld [vmem:[%s220 + $0x20] sm:$0xf]
        %v373 = vld [vmem:[%s220 + $0x24] sm:$0xf]
        %v374 = vld [vmem:[%s220 + $0x28] sm:$0xf]
        %v375 = vld [vmem:[%s220 + $0x2c] sm:$0xf]
        %v376 = vld [vmem:[%s220 + $0x30] sm:$0xf]
        %v377 = vld [vmem:[%s220 + $0x34] sm:$0xf]
        %v378 = vld [vmem:[%s220 + $0x38] sm:$0xf]
        %v379 = vld [vmem:[%s220 + $0x3c] sm:$0xf]
        %v380 = vld [vmem:[#allocation7] sm:$0xf]
        %v381 = vld [vmem:[#allocation7 + $0x4] sm:$0xf]
        %v382 = vld [vmem:[#allocation7 + $0x8] sm:$0xf]
        %v383 = vld [vmem:[#allocation7 + $0xc] sm:$0xf]
        %v384 = vld [vmem:[#allocation7 + $0x10] sm:$0xf]
        %v385 = vld [vmem:[#allocation7 + $0x14] sm:$0xf]
        %v386 = vld [vmem:[#allocation7 + $0x18] sm:$0xf]
        %v387 = vld [vmem:[#allocation7 + $0x1c] sm:$0xf]
        %v388 = vld [vmem:[#allocation7 + $0x20] sm:$0xf]
        %v389 = vld [vmem:[#allocation7 + $0x24] sm:$0xf]
        %v390 = vld [vmem:[#allocation7 + $0x28] sm:$0xf]
        %v391 = vld [vmem:[#allocation7 + $0x2c] sm:$0xf]
        %v392 = vld [vmem:[#allocation7 + $0x30] sm:$0xf]
        %v393 = vld [vmem:[#allocation7 + $0x34] sm:$0xf]
        %v394 = vld [vmem:[#allocation7 + $0x38] sm:$0xf]
        %v395 = vld [vmem:[#allocation7 + $0x3c] sm:$0xf]
        %v412 = vunpack.c.l.b16 %v364
        %v413 = vunpack.c.l.b16 %v365
        %v414 = vunpack.c.l.b16 %v366
        %v415 = vunpack.c.l.b16 %v367
        %v416 = vunpack.c.l.b16 %v368
        %v417 = vunpack.c.l.b16 %v369
        %v418 = vunpack.c.l.b16 %v370
        %v419 = vunpack.c.l.b16 %v371
        %v420 = vunpack.c.l.b16 %v372
        %v421 = vunpack.c.l.b16 %v373
        %v422 = vunpack.c.l.b16 %v374
        %v423 = vunpack.c.l.b16 %v375
        %v424 = vunpack.c.l.b16 %v376
        %v425 = vunpack.c.l.b16 %v377
        %v426 = vunpack.c.l.b16 %v378
        %v427 = vunpack.c.l.b16 %v379
        %v428 = vpack.c.b16 %v413, %v412
        %v429 = vpack.c.b16 %v415, %v414
        %v430 = vpack.c.b16 %v417, %v416
        %v431 = vpack.c.b16 %v419, %v418
        %v432 = vpack.c.b16 %v421, %v420
        %v433 = vpack.c.b16 %v423, %v422
        %v434 = vpack.c.b16 %v425, %v424
        %v435 = vpack.c.b16 %v427, %v426
        %v460 = vunpack.c.l.b16 %v380
        %v461 = vunpack.c.l.b16 %v381
        %v462 = vunpack.c.l.b16 %v382
        %v463 = vunpack.c.l.b16 %v383
        %v464 = vunpack.c.l.b16 %v384
        %v465 = vunpack.c.l.b16 %v385
        %v466 = vunpack.c.l.b16 %v386
        %v467 = vunpack.c.l.b16 %v387
        %v468 = vunpack.c.l.b16 %v388
        %v469 = vunpack.c.l.b16 %v389
        %v470 = vunpack.c.l.b16 %v390
        %v471 = vunpack.c.l.b16 %v391
        %v472 = vunpack.c.l.b16 %v392
        %v473 = vunpack.c.l.b16 %v393
        %v474 = vunpack.c.l.b16 %v394
        %v475 = vunpack.c.l.b16 %v395
        %v476 = vpack.c.b16 %v461, %v460
        %v477 = vpack.c.b16 %v463, %v462
        %v478 = vpack.c.b16 %v465, %v464
        %v479 = vpack.c.b16 %v467, %v466
        %v480 = vpack.c.b16 %v469, %v468
        %v481 = vpack.c.b16 %v471, %v470
        %v482 = vpack.c.b16 %v473, %v472
        %v483 = vpack.c.b16 %v475, %v474
        %492 = vmatprep.subr.bf16.mxu0 0
        %493 = vmatpush1.bf16.msra.mxu0 %v476
        %494 = vmatprep.subr.bf16.mxu0 0
        %495 = vmatpush1.bf16.msra.mxu0 %v477
        %496 = vmatprep.subr.bf16.mxu0 0
        %497 = vmatpush1.bf16.msra.mxu0 %v478
        %498 = vmatprep.subr.bf16.mxu0 0
        %499 = vmatpush1.bf16.msra.mxu0 %v479
        %500 = vmatprep.subr.bf16.mxu0 0
        %501 = vmatpush1.bf16.msra.mxu0 %v480
        %502 = vmatprep.subr.bf16.mxu0 0
        %503 = vmatpush1.bf16.msra.mxu0 %v481
        %504 = vmatprep.subr.bf16.mxu0 0
        %505 = vmatpush1.bf16.msra.mxu0 %v482
        %506 = vmatprep.subr.bf16.mxu0 0
        %507 = vmatpush1.bf16.msra.mxu0 %v483
        %508 = vmatprep.subr.bf16.mxu0 0
        %509 = vmatpush1.bf16.msra.mxu0 0
        %510 = vmatprep.subr.bf16.mxu0 0
        %511 = vmatpush1.bf16.msra.mxu0 0
        %512 = vmatprep.subr.bf16.mxu0 0
        %513 = vmatpush1.bf16.msra.mxu0 0
        %514 = vmatprep.subr.bf16.mxu0 0
        %515 = vmatpush1.bf16.msra.mxu0 0
        %516 = vmatprep.subr.bf16.mxu0 0
        %517 = vmatpush1.bf16.msra.mxu0 0
        %518 = vmatprep.subr.bf16.mxu0 0
        %519 = vmatpush1.bf16.msra.mxu0 0
        %520 = vmatprep.subr.bf16.mxu0 0
        %521 = vmatpush1.bf16.msra.mxu0 0
        %522 = vmatprep.subr.bf16.mxu0 0
        %523 = vmatpush1.bf16.msra.mxu0 0
        %524 = vmatprep.mubr.bf16.mxu0 0
        %525 = vmatmul.mubr.bf16.gmra.mrb[0].mxu0 %v428
        %v526 = vpop.f32.mrb[0].mxu0
        %v527 = vadd.f32 0.0, %v526
        %v528 = vpop.f32.mrb[0].mxu0
        %v529 = vpop.f32.mrb[0].mxu0
        %v530 = vadd.f32 0.0, %v529
        %v531 = vpop.f32.mrb[0].mxu0
        %532 = vmatprep.mubr.bf16.mxu0 0
        %533 = vmatmul.mubr.bf16.gmra.mrb[0].mxu0 %v429
        %v534 = vpop.f32.mrb[0].mxu0
        %v535 = vadd.f32 0.0, %v534
        %v536 = vpop.f32.mrb[0].mxu0
        %v537 = vpop.f32.mrb[0].mxu0
        %v538 = vadd.f32 0.0, %v537
        %v539 = vpop.f32.mrb[0].mxu0
        %540 = vmatprep.mubr.bf16.mxu0 0
        %541 = vmatmul.mubr.bf16.gmra.mrb[0].mxu0 %v430
        %v542 = vpop.f32.mrb[0].mxu0
        %v543 = vadd.f32 0.0, %v542
        %v544 = vpop.f32.mrb[0].mxu0
        %v545 = vpop.f32.mrb[0].mxu0
        %v546 = vadd.f32 0.0, %v545
        %v547 = vpop.f32.mrb[0].mxu0
        %548 = vmatprep.mubr.bf16.mxu0 0
        %549 = vmatmul.mubr.bf16.gmra.mrb[0].mxu0 %v431
        %v550 = vpop.f32.mrb[0].mxu0
        %v551 = vadd.f32 0.0, %v550
        %v552 = vpop.f32.mrb[0].mxu0
        %v553 = vpop.f32.mrb[0].mxu0
        %v554 = vadd.f32 0.0, %v553
        %v555 = vpop.f32.mrb[0].mxu0
        %556 = vmatprep.mubr.bf16.mxu0 0
        %557 = vmatmul.mubr.bf16.gmra.mrb[0].mxu0 %v432
        %v558 = vpop.f32.mrb[0].mxu0
        %v559 = vadd.f32 0.0, %v558
        %v560 = vpop.f32.mrb[0].mxu0
        %v561 = vpop.f32.mrb[0].mxu0
        %v562 = vadd.f32 0.0, %v561
        %v563 = vpop.f32.mrb[0].mxu0
        %564 = vmatprep.mubr.bf16.mxu0 0
        %565 = vmatmul.mubr.bf16.gmra.mrb[0].mxu0 %v433
        %v566 = vpop.f32.mrb[0].mxu0
        %v567 = vadd.f32 0.0, %v566
        %v568 = vpop.f32.mrb[0].mxu0
        %v569 = vpop.f32.mrb[0].mxu0
        %v570 = vadd.f32 0.0, %v569
        %v571 = vpop.f32.mrb[0].mxu0
        %572 = vmatprep.mubr.bf16.mxu0 0
        %573 = vmatmul.mubr.bf16.gmra.mrb[0].mxu0 %v434
        %v574 = vpop.f32.mrb[0].mxu0
        %v575 = vadd.f32 0.0, %v574
        %v576 = vpop.f32.mrb[0].mxu0
        %v577 = vpop.f32.mrb[0].mxu0
        %v578 = vadd.f32 0.0, %v577
        %v579 = vpop.f32.mrb[0].mxu0
        %580 = vmatprep.mubr.bf16.mxu0 0
        %581 = vmatmul.mubr.bf16.gmra.mrb[0].mxu0 %v435
        %v582 = vpop.f32.mrb[0].mxu0
        %v583 = vadd.f32 0.0, %v582
        %v584 = vpop.f32.mrb[0].mxu0
        %v585 = vpop.f32.mrb[0].mxu0
        %v586 = vadd.f32 0.0, %v585
        %v587 = vpop.f32.mrb[0].mxu0
        %588 = vdwg.mxu0
        %v589 = vpack.c.bf16 %v359, %v359
        %v590 = vpack.c.bf16 %v530, %v527
        %v591 = vpack.c.bf16 %v538, %v535
        %v592 = vpack.c.bf16 %v546, %v543
        %v593 = vpack.c.bf16 %v554, %v551
        %v594 = vpack.c.bf16 %v562, %v559
        %v595 = vpack.c.bf16 %v570, %v567
        %v596 = vpack.c.bf16 %v578, %v575
        %v597 = vpack.c.bf16 %v586, %v583
        %598 = vmatprep.subr.bf16.mxu0 0
        %599 = vmatpush1.bf16.xpose.msra.mxu0 %v590
        %600 = vmatprep.subr.bf16.mxu0 0
        %601 = vmatpush1.bf16.xpose.msra.mxu0 %v591
        %602 = vmatprep.subr.bf16.mxu0 0
        %603 = vmatpush1.bf16.xpose.msra.mxu0 %v592
        %604 = vmatprep.subr.bf16.mxu0 0
        %605 = vmatpush1.bf16.xpose.msra.mxu0 %v593
        %606 = vmatprep.subr.bf16.mxu0 0
        %607 = vmatpush1.bf16.xpose.msra.mxu0 %v594
        %608 = vmatprep.subr.bf16.mxu0 0
        %609 = vmatpush1.bf16.xpose.msra.mxu0 %v595
        %610 = vmatprep.subr.bf16.mxu0 0
        %611 = vmatpush1.bf16.xpose.msra.mxu0 %v596
        %612 = vmatprep.subr.bf16.mxu0 0
        %613 = vmatpush1.bf16.xpose.msra.mxu0 %v597
        %614 = vmatprep.subr.bf16.mxu0 0
        %615 = vmatpush1.bf16.xpose.msra.mxu0 0
        %616 = vmatprep.subr.bf16.mxu0 0
        %617 = vmatpush1.bf16.xpose.msra.mxu0 0
        %618 = vmatprep.subr.bf16.mxu0 0
        %619 = vmatpush1.bf16.xpose.msra.mxu0 0
        %620 = vmatprep.subr.bf16.mxu0 0
        %621 = vmatpush1.bf16.xpose.msra.mxu0 0
        %622 = vmatprep.subr.bf16.mxu0 0
        %623 = vmatpush1.bf16.xpose.msra.mxu0 0
        %624 = vmatprep.subr.bf16.mxu0 0
        %625 = vmatpush1.bf16.xpose.msra.mxu0 0
        %626 = vmatprep.subr.bf16.mxu0 0
        %627 = vmatpush1.bf16.xpose.msra.mxu0 0
        %628 = vmatprep.subr.bf16.mxu0 0
        %629 = vmatpush1.bf16.xpose.msra.mxu0 0
        %630 = vmatprep.mubr.bf16.mxu0 0
        %631 = vmatmul.mubr.bf16.gmra.mrb[0].mxu0 %v589
        %v632 = vpop.f32.mrb[0].mxu0
        %v633 = vadd.f32 0.0, %v632
        %v634 = vpop.f32.mrb[0].mxu0
        %v635 = vpop.f32.mrb[0].mxu0
        %v636 = vpop.f32.mrb[0].mxu0
        %637 = vdwg.mxu0
        %638 = vst [vmem:[%s254] sm:$0x1] %v633
        %s639 = sand.u32 %s124, 1
        %s640 = scalar_lea.sflag [#allocation4], %s639
        %s641 = sand.u32 %s124, 1
        %s642 = scalar_lea.vmem [#allocation8], %s641
        // Predicated region
        $region49: #{tpu_custom_call.1} parent=35 // pred_check
          %p643 = pneg %p134
        $region50: #{tpu_custom_call.1} parent=35 // pred_check_branch
          %645 = sbr.rel (%p643) target = $region52
        $region51: #{tpu_custom_call.1} parent=35 // pred_region
          %s647 = ssub.s32 16, 16
          %648 = vsyncadd %s640, %s647
          %s649 = smul.addr %s22, 16
          %s650 = scalar_lea.hbm %s4, %s649
          %s652 = sshll.u32 %s642, 4
          %s653 = int_to_ptr.vmem [resolvable:$true] %s652
          %655 = dma.vmem_to_hbm [thread:$0]  %s653, 16, %s650, %s640
        $region52: #{tpu_custom_call.1} parent=35 // pred_fallthru
          _
      $region36: #{tpu_custom_call.1} parent=5 // pred_fallthru
        _
      %p656 = scmp.le.s32.totalorder 2, %s17
      // Predicated region
      $region53: #{tpu_custom_call.1} parent=5 // pred_check
        %p657 = pneg %p656
      $region54: #{tpu_custom_call.1} parent=5 // pred_check_branch
        %659 = sbr.rel (%p657) target = $region56
      $region55: #{tpu_custom_call.1} parent=5 // pred_region
        %s660 = ssub.s32 %s17, 2
        // Predicated region
        $region57: #{tpu_custom_call.1} parent=55 // pred_check
          %p661 = pneg %p140
        $region58: #{tpu_custom_call.1} parent=55 // pred_check_branch
          %663 = sbr.rel (%p661) target = $region60
        $region59: #{tpu_custom_call.1} parent=55 // pred_region
          %s664 = sand.u32 %s125, 1
          %s665 = scalar_lea.sflag [#allocation4], %s664
          %s666 = sand.u32 %s125, 1
          %s667 = scalar_lea.vmem [#allocation8], %s666
          %668 = dma.done %s665, 16
        $region60: #{tpu_custom_call.1} parent=55 // pred_fallthru
          _
      $region56: #{tpu_custom_call.1} parent=5 // pred_fallthru
        _
    $region6: #{tpu_custom_call.1} parent=1 // loop_footer
      %s21 = sadd.s32 1, %s17
    $region7: #{tpu_custom_call.1} parent=1 // loop_footer_branch
      %16 = sbr.rel target = $region3
    $region8: #{tpu_custom_call.1} parent=1 // loop_exit
      _
    %669 = vsyncpa [#allocation3], 1
    %s670 = scalar_lea.sflag [#allocation3], 1
    %671 = vsyncpa %s670, 1
    %672 = vsyncpa [#allocation6], 1
    %673 = vsyncpa [#allocation4], 1
    %s674 = scalar_lea.sflag [#allocation4], 1
    %675 = vsyncpa %s674, 1

</llo_original>
